<compile_context>
chip_gen: v6e
topology: v6e:2x2x1
jax: 0.10.0
libtpu: 0.0.40
codegen_flags: <defaults>
</compile_context>

<pallas_src>
import jax
import jax.numpy as jnp
from jax.experimental import pallas as pl
from jax.experimental.pallas import tpu as pltpu

EPS = 1e-5


def _pick_hw_tile(hw, c_in, c_out, in_itemsize, out_itemsize,
                  vmem_budget_bytes=8 << 20):
    """Largest multiple-of-128 tile dividing hw that fits the VMEM budget.

    Budget accounts for double-buffered input + output tiles.  Falls back to
    the full extent when hw is not a multiple of 128 (Pallas allows a block
    dim equal to the full array dim).
    """
    if hw % 128 != 0:
        # TODO(synk): ragged spatial sizes fall back to a single full-extent tile.
        return hw
    per_pixel = 2 * (c_in * in_itemsize + c_out * out_itemsize)  # 2x = dbl-buffer
    cap = max(128, vmem_budget_bytes // max(per_pixel, 1))
    t = min(hw, cap - cap % 128, 4096)
    t = max(t, 128)
    while hw % t != 0:
        t -= 128
    return t


def _stats_kernel(x_ref, w_ref, stats_ref):
    # x_ref:     (1, C_in, T)   one spatial tile of one image (NCHW-native)
    # w_ref:     (C_out, C_in)  1x1 conv weight (torch layout, squeezed)
    # stats_ref: (C_out, 2)     accumulated [sum(y), sum(y^2)] per channel
    n = pl.program_id(0)
    t = pl.program_id(1)

    @pl.when(jnp.logical_and(n == 0, t == 0))
    def _():
        stats_ref[...] = jnp.zeros_like(stats_ref)

    x = x_ref[0].astype(jnp.float32)                        # (C_in, T)
    w = w_ref[...].astype(jnp.float32)                      # (C_out, C_in)
    y = jnp.dot(w, x, preferred_element_type=jnp.float32)   # (C_out, T)  MXU

    s1 = jnp.sum(y, axis=1, keepdims=True)                  # (C_out, 1)  XLU
    s2 = jnp.sum(y * y, axis=1, keepdims=True)               # (C_out, 1)
    stats_ref[...] += jnp.concatenate([s1, s2], axis=1)      # resident in VMEM


def _normalize_kernel(x_ref, w_ref, shift_ref, o_ref):
    # x_ref:     (1, C_in, T)
    # w_ref:     (C_out, C_in)  conv weight with BN scale pre-folded in (f32)
    # shift_ref: (C_out, 1)     beta - mean*scale
    # o_ref:     (1, C_out, T)  lane-dense output tile, already NCHW order
    x = x_ref[0].astype(jnp.float32)                         # (C_in, T)
    w = w_ref[...]                                           # (C_out, C_in)
    y = jnp.dot(w, x, preferred_element_type=jnp.float32)    # (C_out, T)
    o_ref[0] = (y + shift_ref[...]).astype(o_ref.dtype)


def mapping_forward(x_nchw, weight_oi, gamma, beta, eps=EPS):
    """x_nchw: (N, C_in, H, W); weight_oi: (C_out, C_in); gamma/beta: (C_out,)."""
    N, C_in, H, W = x_nchw.shape
    C_out = weight_oi.shape[0]
    HW = H * W
    M = N * HW

    x = x_nchw.reshape(N, C_in, HW)                 # view; no HBM transpose
    w = weight_oi.astype(jnp.float32)               # (C_out, C_in)

    T = _pick_hw_tile(HW, C_in, C_out,
                      x_nchw.dtype.itemsize, x_nchw.dtype.itemsize)
    grid = (N, HW // T)

    x_spec = pl.BlockSpec((1, C_in, T), lambda n, t: (n, 0, t))
    w_spec = pl.BlockSpec((C_out, C_in), lambda n, t: (0, 0))  # resident weight

    x_bytes = x.size * x.dtype.itemsize
    w_bytes = w.size * 4
    o_bytes = M * C_out * x_nchw.dtype.itemsize
    mm_flops = 2 * M * C_in * C_out

    # ---- Phase 1: per-channel sum(y), sum(y^2) over all pixels ---------------
    stats = pl.pallas_call(
        _stats_kernel,
        out_shape=jax.ShapeDtypeStruct((C_out, 2), jnp.float32),
        grid=grid,
        in_specs=[x_spec, w_spec],
        out_specs=pl.BlockSpec((C_out, 2), lambda n, t: (0, 0)),
        compiler_params=pltpu.CompilerParams(
            dimension_semantics=("arbitrary", "arbitrary")),
        cost_estimate=pl.CostEstimate(
            flops=mm_flops + 3 * M * C_out,
            transcendentals=0,
            bytes_accessed=x_bytes + w_bytes + C_out * 2 * 4),
    )(x, w)

    # Tiny per-channel math in plain JAX: fold BN into scale/shift, fold scale
    # into the conv weight so the phase-2 hot path is matmul + add.
    sum_y = stats[:, 0]
    sum_y2 = stats[:, 1]
    mean = sum_y / M
    var = jnp.maximum(sum_y2 / M - mean * mean, 0.0)   # biased batch variance
    inv_std = jax.lax.rsqrt(var + eps)
    scale = gamma.astype(jnp.float32) * inv_std                     # (C_out,)
    shift = (beta.astype(jnp.float32) - mean * scale).reshape(C_out, 1)
    w_scaled = w * scale[:, None]                                   # (C_out, C_in)

    # ---- Phase 2: recompute y per tile and apply folded affine ---------------
    out = pl.pallas_call(
        _normalize_kernel,
        out_shape=jax.ShapeDtypeStruct((N, C_out, HW), x_nchw.dtype),
        grid=grid,
        in_specs=[
            x_spec,
            w_spec,
            pl.BlockSpec((C_out, 1), lambda n, t: (0, 0)),
        ],
        out_specs=pl.BlockSpec((1, C_out, T), lambda n, t: (n, 0, t)),
        compiler_params=pltpu.CompilerParams(
            dimension_semantics=("parallel", "parallel")),
        cost_estimate=pl.CostEstimate(
            flops=mm_flops + 2 * M * C_out,
            transcendentals=0,
            bytes_accessed=x_bytes + w_bytes + o_bytes),
    )(x, w_scaled, shift)

    return out.reshape(N, C_out, H, W)


def mapping_reference(x_nchw, weight_oi, gamma, beta):
    """Pure-JAX reference matching PyTorch Conv2d(1x1, bias=False)+BatchNorm2d(train)."""
    y = jnp.einsum("nchw,oc->nohw", x_nchw.astype(jnp.float32),
                   weight_oi.astype(jnp.float32))
    mean = jnp.mean(y, axis=(0, 2, 3), keepdims=True)
    var = jnp.mean((y - mean) ** 2, axis=(0, 2, 3), keepdims=True)
    out = (y - mean) * jax.lax.rsqrt(var + EPS)
    out = out * gamma.reshape(1, -1, 1, 1) + beta.reshape(1, -1, 1, 1)
    return out.astype(x_nchw.dtype)


if __name__ == "__main__":
    key = jax.random.PRNGKey(0)
    k_x, k_w = jax.random.split(key)

    N, C_in, H, W = 2, 4, 16, 16
    C_out = 8

    x = jax.random.normal(k_x, (N, C_in, H, W), dtype=jnp.float32)
    # Deterministic parameter init (synthetic — not loaded from a checkpoint).
    weight = jax.random.normal(k_w, (C_out, C_in), dtype=jnp.float32) * 0.1
    gamma = jnp.ones((C_out,), dtype=jnp.float32)   # BatchNorm2d default init
    beta = jnp.zeros((C_out,), dtype=jnp.float32)

    out = mapping_forward(x, weight, gamma, beta)
    out = jax.block_until_ready(out)

    ref = mapping_reference(x, weight, gamma, beta)
    assert out.shape == (N, C_out, H, W)
    assert jnp.allclose(out, ref, atol=1e-4, rtol=1e-4)

    print("KERNEL_OK")
</pallas_src>

<mosaic_0001>
module attributes {stable_mosaic.version = 11 : i64} {
  func.func @_stats_kernel(%arg0: i32, %arg1: i32, %arg2: memref<1x4x256xf32, #tpu.memory_space<vmem>>, %arg3: memref<8x4xf32, #tpu.memory_space<vmem>>, %arg4: memref<8x2xf32, #tpu.memory_space<vmem>>) attributes {dimension_semantics = [#tpu.dimension_semantics<arbitrary>, #tpu.dimension_semantics<arbitrary>], iteration_bounds = array<i64: 2, 1>, scalar_prefetch = 0 : i64, scratch_operands = 0 : i64, tpu.core_type = #tpu.core_type<tc>, window_params = [{transform_indices = @transform_0, window_bounds = array<i64: 1, 4, 256>}, {pipeline_mode = #tpu.pipeline_mode<synchronous>, transform_indices = @transform_1, window_bounds = array<i64: 8, 4>}, {pipeline_mode = #tpu.pipeline_mode<synchronous>, transform_indices = @transform_2, window_bounds = array<i64: 8, 2>}]} {
    %c0_i32 = arith.constant 0 : i32
    %0 = arith.cmpi eq, %arg0, %c0_i32 : i32
    %c0_i32_0 = arith.constant 0 : i32
    %1 = arith.cmpi eq, %arg1, %c0_i32_0 : i32
    %2 = arith.andi %0, %1 : i1
    %3 = arith.extui %2 : i1 to i32
    %c0_i32_1 = arith.constant 0 : i32
    %4 = arith.cmpi ne, %3, %c0_i32_1 : i32
    scf.if %4 {
      %cst_12 = arith.constant 0.000000e+00 : f32
      %18 = vector.broadcast %cst_12 : f32 to vector<8x2xf32>
      %c0_13 = arith.constant 0 : index
      %c0_14 = arith.constant 0 : index
      %19 = vector.load %arg4[%c0_13, %c0_14] : memref<8x2xf32, #tpu.memory_space<vmem>>, vector<8x2xf32>
      tpu.vector_store %arg4[%c0_13, %c0_14], %18 {strides = array<i32>} : memref<8x2xf32, #tpu.memory_space<vmem>>, vector<8x2xf32>,
    } else {
    }
    %c0 = arith.constant 0 : index
    %c0_2 = arith.constant 0 : index
    %c0_3 = arith.constant 0 : index
    %5 = vector.load %arg2[%c0, %c0_2, %c0_3] : memref<1x4x256xf32, #tpu.memory_space<vmem>>, vector<1x4x256xf32>
    %6 = vector.shape_cast %5 : vector<1x4x256xf32> to vector<4x256xf32>
    %c0_4 = arith.constant 0 : index
    %c0_5 = arith.constant 0 : index
    %7 = vector.load %arg3[%c0_4, %c0_5] : memref<8x4xf32, #tpu.memory_space<vmem>>, vector<8x4xf32>
    %cst = arith.constant dense<0.000000e+00> : vector<8x256xf32>
    %8 = tpu.matmul %7, %6, %cst {dimension_numbers = #tpu.dot_dimension_numbers<[1], [0], [0], [1], [0, 0, 1, 1], [], []>} : vector<8x4xf32>, vector<4x256xf32>, vector<8x256xf32> -> vector<8x256xf32>
    %cst_6 = arith.constant dense<0.000000e+00> : vector<8xf32>
    %9 = vector.multi_reduction <add>, %8, %cst_6 [1] : vector<8x256xf32> to vector<8xf32>
    %10 = vector.shape_cast %9 : vector<8xf32> to vector<8x1xf32>
    %11 = arith.mulf %8, %8 : vector<8x256xf32>
    %cst_7 = arith.constant dense<0.000000e+00> : vector<8xf32>
    %12 = vector.multi_reduction <add>, %11, %cst_7 [1] : vector<8x256xf32> to vector<8xf32>
    %13 = vector.shape_cast %12 : vector<8xf32> to vector<8x1xf32>
    %c0_8 = arith.constant 0 : index
    %c0_9 = arith.constant 0 : index
    %14 = vector.load %arg4[%c0_8, %c0_9] : memref<8x2xf32, #tpu.memory_space<vmem>>, vector<8x2xf32>
    %15 = tpu.concatenate %10, %13 in 1 : vector<8x1xf32>, vector<8x1xf32> -> vector<8x2xf32>
    %16 = arith.addf %14, %15 : vector<8x2xf32>
    %c0_10 = arith.constant 0 : index
    %c0_11 = arith.constant 0 : index
    %17 = vector.load %arg4[%c0_10, %c0_11] : memref<8x2xf32, #tpu.memory_space<vmem>>, vector<8x2xf32>
    tpu.vector_store %arg4[%c0_10, %c0_11], %16 {strides = array<i32>} : memref<8x2xf32, #tpu.memory_space<vmem>>, vector<8x2xf32>,
    return
  }
  func.func @transform_0(%arg0: i32, %arg1: i32) -> (i32, i32, i32) {
    %c0_i32 = arith.constant 0 : i32
    %c0_i32_0 = arith.constant 0 : i32
    return %arg0, %c0_i32, %arg1 : i32, i32, i32
  }
  func.func @transform_1(%arg0: i32, %arg1: i32) -> (i32, i32) {
    %c0_i32 = arith.constant 0 : i32
    %c0_i32_0 = arith.constant 0 : i32
    %c0_i32_1 = arith.constant 0 : i32
    return %c0_i32, %c0_i32_0 : i32, i32
  }
  func.func @transform_2(%arg0: i32, %arg1: i32) -> (i32, i32) {
    %c0_i32 = arith.constant 0 : i32
    %c0_i32_0 = arith.constant 0 : i32
    %c0_i32_1 = arith.constant 0 : i32
    return %c0_i32, %c0_i32_0 : i32, i32
  }
}

</mosaic_0001>

<llo_original>
// kernel: tpu_custom_call.1
$region0: #{tpu_custom_call.1}
  #allocation0 [shape = 'u32[]', space=smem, size = 0x4, offset = 0x4, fixed_abs, tag = 'smem constant byte address 0x4 - core index']
  #allocation1 [shape = 'u32[144,128]{1,0:T(1,128)}', space=vmem, size = 0x12000, scoped, tag = 'internal scratch']
  %s0 = inlined_call_operand.hbm [shape: f32[2,4,256], index: 0, kind: input, shape index: {}]
  %s1 = inlined_call_operand.vmem [shape: f32[8,4], index: 1, kind: input, shape index: {}]
  %s2 = inlined_call_operand.vmem [shape: f32[8,2], index: 2, kind: output, shape index: {}]
  %s3 = sld [smem:[#allocation0]]
  $region49: #{tpu_custom_call.1} parent=0
    _
  %s5 = ssub.s32 1, %s3
  %s6 = scalar_select 0, %s5, %s3
  $region1: #{tpu_custom_call.1} parent=0
    #allocation2 [shape = 'u8[8192]{0}', space=vmem, size = 0x2000, scoped, tag = 'input window, operand 0']
    #allocation3 [shape = 's32[2]{0}', space=sflag, size = 0x8, scoped, tag = 'scoped memory for tpu_custom_call.1']
    %7 = vsyncpa [#allocation3], 0
    %s8 = scalar_lea.sflag [#allocation3], 1
    %9 = vsyncpa %s8, 0
    loop: start=0, step=1, limit=4
    $region2: #{tpu_custom_call.1} parent=1 // loop_pre_header
      _
    $region3: #{tpu_custom_call.1} parent=1 // loop_header
      %s11 = sphi 0, %s15
      %p12 = scmp.ge.s32.totalorder %s11, 4
      %s18 = sphi 0, %s30
      %s19 = sphi 0, %s26
      %s20 = sphi 0, %s18
      %s21 = sphi 0, %s19
      %s22 = sphi 0, %s20
      %s23 = sphi 0, %s21
      %s35 = sphi 0, %s37
      %s38 = sphi 0, %s35
      %s39 = sphi 0, %s38
      %s55 = sphi 0, %s39
      %s59 = sphi 0, %s59
      %s61 = sphi 0, %s59
      %s62 = sphi 0, %s61
      %s76 = sphi 0, %s62
      %s80 = sphi 0, %s80
      %s82 = sphi 0, %s80
      %s83 = sphi 0, %s82
      %s97 = sphi 0, %s83
    $region4: #{tpu_custom_call.1} parent=1 // loop_header_branch
      %14 = sbr.rel (%p12) target = $region8
    $region5: #{tpu_custom_call.1} parent=1 // loop_body
      %s16 = ssub.s32 %s11, 1
      %s17 = ssub.s32 %s11, 2
      %s24 = sadd.s32 1, %s19
      %p25 = scmp.ge.s32.totalorder %s24, 1
      %s26 = scalar_select %p25, 0, %s24
      %s27 = sadd.s32 1, %s18
      %s28 = scalar_select %p25, %s27, %s18
      %p29 = scmp.ge.s32.totalorder %s28, 2
      %s30 = scalar_select %p29, 0, %s28
      %s31 = ssub.s32 %s18, %s30
      %s32 = ssub.s32 %s19, %s26
      %s33 = sor.u32 %s31, %s32
      %p34 = scmp.eq.s32.totalorder %s33, 0
      %s36 = sadd.s32 %s35, 1
      %s37 = scalar_select %p34, %s35, %s36
      %p40 = pneg %p34
      %p41 = scmp.eq.s32.totalorder %s11, 1
      %p42 = por %p40, %p41
      %p43 = scmp.ne.s32.totalorder %s35, %s38
      %p44 = scmp.eq.s32.totalorder %s11, 0
      %p45 = por %p43, %p44
      %p46 = scmp.ne.s32.totalorder %s35, %s38
      %p47 = scmp.eq.s32.totalorder %s16, 1
      %p48 = por %p46, %p47
      %p49 = scmp.ne.s32.totalorder %s38, %s39
      %p50 = scmp.eq.s32.totalorder %s16, 0
      %p51 = por %p49, %p50
      %p52 = scmp.ne.s32.totalorder %s38, %s39
      %p53 = scmp.eq.s32.totalorder %s17, 1
      %p54 = por %p52, %p53
      %p56 = scmp.ne.s32.totalorder %s39, %s55
      %p57 = scmp.eq.s32.totalorder %s17, 0
      %p58 = por %p56, %p57
      %s60 = sadd.s32 %s59, 1
      %p63 = scmp.eq.s32.totalorder %s11, 1
      %p64 = scmp.ne.s32.totalorder %s59, %s61
      %p65 = scmp.eq.s32.totalorder %s11, 0
      %p66 = por %p64, %p65
      %p67 = scmp.ne.s32.totalorder %s59, %s61
      %p68 = scmp.eq.s32.totalorder %s16, 1
      %p69 = por %p67, %p68
      %p70 = scmp.ne.s32.totalorder %s61, %s62
      %p71 = scmp.eq.s32.totalorder %s16, 0
      %p72 = por %p70, %p71
      %p73 = scmp.ne.s32.totalorder %s61, %s62
      %p74 = scmp.eq.s32.totalorder %s17, 1
      %p75 = por %p73, %p74
      %p77 = scmp.ne.s32.totalorder %s62, %s76
      %p78 = scmp.eq.s32.totalorder %s17, 0
      %p79 = por %p77, %p78
      %s81 = sadd.s32 %s80, 1
      %p84 = scmp.eq.s32.totalorder %s11, 1
      %p85 = scmp.ne.s32.totalorder %s80, %s82
      %p86 = scmp.eq.s32.totalorder %s11, 0
      %p87 = por %p85, %p86
      %p88 = scmp.ne.s32.totalorder %s80, %s82
      %p89 = scmp.eq.s32.totalorder %s16, 1
      %p90 = por %p88, %p89
      %p91 = scmp.ne.s32.totalorder %s82, %s83
      %p92 = scmp.eq.s32.totalorder %s16, 0
      %p93 = por %p91, %p92
      %p94 = scmp.ne.s32.totalorder %s82, %s83
      %p95 = scmp.eq.s32.totalorder %s17, 1
      %p96 = por %p94, %p95
      %p98 = scmp.ne.s32.totalorder %s83, %s97
      %p99 = scmp.eq.s32.totalorder %s17, 0
      %p100 = por %p98, %p99
      %p101 = scmp.le.s32.totalorder 1, %s11
      %p102 = scmp.lt.s32.totalorder %s11, 3
      %p103 = pnand %p101, %p102
      %p104 = pneg %p103
      // Predicated region
      $region9: #{tpu_custom_call.1} parent=5 // pred_check
        _
      $region10: #{tpu_custom_call.1} parent=5 // pred_check_branch
        %106 = sbr.rel (%p103) target = $region12
      $region11: #{tpu_custom_call.1} parent=5 // pred_region
        %s107 = ssub.s32 %s11, 1
        // Predicated region
        $region13: #{tpu_custom_call.1} parent=11 // pred_check
          %p108 = pneg %p72
        $region14: #{tpu_custom_call.1} parent=11 // pred_check_branch
          %110 = sbr.rel (%p108) target = $region16
        $region15: #{tpu_custom_call.1} parent=11 // pred_region
          _
        $region16: #{tpu_custom_call.1} parent=11 // pred_fallthru
          _
      $region12: #{tpu_custom_call.1} parent=5 // pred_fallthru
        _
      %p111 = scmp.lt.s32.totalorder %s11, 2
      // Predicated region
      $region17: #{tpu_custom_call.1} parent=5 // pred_check
        %p112 = pneg %p111
      $region18: #{tpu_custom_call.1} parent=5 // pred_check_branch
        %114 = sbr.rel (%p112) target = $region20
      $region19: #{tpu_custom_call.1} parent=5 // pred_region
        // Predicated region
        $region21: #{tpu_custom_call.1} parent=19 // pred_check
          %p115 = pneg %p45
        $region22: #{tpu_custom_call.1} parent=19 // pred_check_branch
          %117 = sbr.rel (%p115) target = $region24
        $region23: #{tpu_custom_call.1} parent=19 // pred_region
          %s118 = sand.u32 %s35, 1
          %s119 = scalar_lea.sflag [#allocation3], %s118
          %s120 = sand.u32 %s35, 1
          %s121 = smul.addr %s120, 8
          %s122 = scalar_lea.vmem [#allocation2], %s121
          %s123 = smul.u32 2, %s19
          %s125 = ssub.s32 128, 128
          %126 = vsyncadd %s119, %s125
          %s127 = smul.addr %s18, 2
          %s128 = sadd.s32 %s123, %s127
          %s129 = smul.addr %s128, 64
          %s130 = scalar_lea.hbm %s0, %s129
          %s132 = sshll.u32 %s122, 4
          %s133 = int_to_ptr.vmem [resolvable:$true] %s132
          %135 = dma.hbm_to_vmem [thread:$0]  %s130, 128, %s133, %s119
        $region24: #{tpu_custom_call.1} parent=19 // pred_fallthru
          _
      $region20: #{tpu_custom_call.1} parent=5 // pred_fallthru
        _
      %p136 = scmp.le.s32.totalorder 1, %s11
      %p137 = scmp.lt.s32.totalorder %s11, 3
      %p138 = pnand %p136, %p137
      %p139 = pneg %p138
      // Predicated region
      $region25: #{tpu_custom_call.1} parent=5 // pred_check
        _
      $region26: #{tpu_custom_call.1} parent=5 // pred_check_branch
        %141 = sbr.rel (%p138) target = $region28
      $region27: #{tpu_custom_call.1} parent=5 // pred_region
        %s142 = ssub.s32 %s11, 1
        %s143 = sand.u32 %s38, 1
        %s144 = scalar_lea.sflag [#allocation3], %s143
        %s145 = sand.u32 %s38, 1
        %s146 = smul.addr %s145, 8
        %s147 = scalar_lea.vmem [#allocation2], %s146
        // Predicated region
        $region29: #{tpu_custom_call.1} parent=27 // pred_check
          %p148 = pneg %p51
        $region30: #{tpu_custom_call.1} parent=27 // pred_check_branch
          %150 = sbr.rel (%p148) target = $region32
        $region31: #{tpu_custom_call.1} parent=27 // pred_region
          %151 = dma.done %s144, 128
        $region32: #{tpu_custom_call.1} parent=27 // pred_fallthru
          _
        %s152 = sand.u32 %s38, 1
        %s153 = scalar_lea.sflag [#allocation3], %s152
        %s154 = sand.u32 %s38, 1
        %s155 = smul.addr %s154, 8
        %s156 = scalar_lea.vmem [#allocation2], %s155
        %p157 = pneg %p51
        %p158 = pneg %p48
        %p159 = pneg %p72
        %p160 = pneg %p69
        %p161 = pneg %p93
        %p162 = pneg %p90
        %s163 = smul.u32 2, %s21
        %p164 = scmp.eq.s32.totalorder %s20, 0
        %p165 = scmp.eq.s32.totalorder %s21, 0
        %p166 = pnand %p164, %p165
        %p167 = pneg %p166
        // Predicated region
        $region33: #{tpu_custom_call.1} parent=27 // pred_check
          _
        $region34: #{tpu_custom_call.1} parent=27 // pred_check_branch
          %169 = sbr.rel (%p166) target = $region36
        $region35: #{tpu_custom_call.1} parent=27 // pred_region
          %vm170 = vcmask 15360
          %171 = vst.msk [vmem:[%s2] sm:$0xff] %vm170, 0.0
        $region36: #{tpu_custom_call.1} parent=27 // pred_fallthru
          _
        %v172 = vld [vmem:[%s147] sm:$0xff]
        %v173 = vld [vmem:[%s1] sm:$0xff]
        %v175 = vcombine.high %v172, %v172
        %vm176 = vcmask 31744
        %v178 = vsel %vm176, %v173, 0
        %vm180 = vcmask 1043456
        %v181 = vsel %vm180, %v172, 0
        %v183 = vsel %vm180, %v175, 0
        %185 = vmatprep.subr.mxu0 0.0
        %186 = vmatpush1.msra.mxu0 0.0
        %187 = vmatprep.subr.mxu0 0.0
        %188 = vmatpush1.msra.mxu0 0.0
        %189 = vmatprep.subr.mxu0 0.0
        %190 = vmatpush1.msra.mxu0 0.0
        %191 = vmatprep.subr.mxu0 0.0
        %192 = vmatpush1.msra.mxu0 0.0
        %193 = vmatprep.subr.mxu0 0.0
        %194 = vmatpush1.msra.mxu0 0.0
        %195 = vmatprep.subr.mxu0 0.0
        %196 = vmatpush1.msra.mxu0 0.0
        %197 = vmatprep.subr.mxu0 0.0
        %198 = vmatpush1.msra.mxu0 0.0
        %199 = vmatprep.subr.mxu0 0.0
        %200 = vmatpush1.msra.mxu0 0.0
        %201 = vmatprep.subr.mxu0 0.0
        %202 = vmatpush1.msra.mxu0 0.0
        %203 = vmatprep.subr.mxu0 0.0
        %204 = vmatpush1.msra.mxu0 0.0
        %205 = vmatprep.subr.mxu0 0.0
        %206 = vmatpush1.msra.mxu0 0.0
        %207 = vmatprep.subr.mxu0 0.0
        %208 = vmatpush1.msra.mxu0 0.0
        %209 = vmatprep.subr.mxu0 0.0
        %210 = vmatpush1.msra.mxu0 0.0
        %211 = vmatprep.subr.mxu0 0.0
        %212 = vmatpush1.msra.mxu0 0.0
        %213 = vmatprep.subr.mxu0 0.0
        %214 = vmatpush1.msra.mxu0 0.0
        %215 = vmatprep.subr.mxu0 %v183
        %216 = vmatpush1.msra.mxu0 %v181
        %217 = vmatprep.subr.mxu0 0.0
        %218 = vmatpush2.msra.mxu0 0.0
        %219 = vmatprep.subr.mxu0 0.0
        %220 = vmatpush2.msra.mxu0 0.0
        %221 = vmatprep.subr.mxu0 0.0
        %222 = vmatpush2.msra.mxu0 0.0
        %223 = vmatprep.subr.mxu0 0.0
        %224 = vmatpush2.msra.mxu0 0.0
        %225 = vmatprep.subr.mxu0 0.0
        %226 = vmatpush2.msra.mxu0 0.0
        %227 = vmatprep.subr.mxu0 0.0
        %228 = vmatpush2.msra.mxu0 0.0
        %229 = vmatprep.subr.mxu0 0.0
        %230 = vmatpush2.msra.mxu0 0.0
        %231 = vmatprep.subr.mxu0 0.0
        %232 = vmatpush2.msra.mxu0 0.0
        %233 = vmatprep.subr.mxu0 0.0
        %234 = vmatpush2.msra.mxu0 0.0
        %235 = vmatprep.subr.mxu0 0.0
        %236 = vmatpush2.msra.mxu0 0.0
        %237 = vmatprep.subr.mxu0 0.0
        %238 = vmatpush2.msra.mxu0 0.0
        %239 = vmatprep.subr.mxu0 0.0
        %240 = vmatpush2.msra.mxu0 0.0
        %241 = vmatprep.subr.mxu0 0.0
        %242 = vmatpush2.msra.mxu0 0.0
        %243 = vmatprep.subr.mxu0 0.0
        %244 = vmatpush2.msra.mxu0 0.0
        %245 = vmatprep.subr.mxu0 0.0
        %246 = vmatpush2.msra.mxu0 0.0
        %247 = vmatprep.subr.mxu0 0.0
        %248 = vmatpush2.msra.mxu0 0.0
        %249 = vmatprep.mubr.f32.mxu0 0.0
        %250 = vmatmul.mubr.f32.gmra.mxu0 %v178
        %v251 = vpop.f32.mrf.mxu0
        %v252 = vadd.f32 0.0, %v251
        %v253 = vpop.f32.mrf.mxu0
        %v254 = vadd.f32 0.0, %v253
        %255 = vdwg.mxu0
        %v256 = vadd.f32 %v252, %v254
        %257 = vadd.xlane.f32.xlu0 %v256
        %v258 = vpop.xlane.xlu0 %257
        %v259 = vmul.f32 %v252, %v252
        %v260 = vmul.f32 %v254, %v254
        %v261 = vadd.f32 %v259, %v260
        %262 = vadd.xlane.f32.xlu0 %v261
        %v263 = vpop.xlane.xlu0 %262
        %v264 = vld [vmem:[%s2] sm:$0xff]
        %vm265 = vcmask 7168
        %v266 = vsel %vm265, %v258, %v263
        %v267 = vadd.f32 %v264, %v266
        %vm268 = vcmask 15360
        %269 = vst.msk [vmem:[%s2] sm:$0xff] %vm268, %v267
        // Predicated region
        $region37: #{tpu_custom_call.1} parent=27 // pred_check
          %p270 = pneg %p90
        $region38: #{tpu_custom_call.1} parent=27 // pred_check_branch
          %272 = sbr.rel (%p270) target = $region40
        $region39: #{tpu_custom_call.1} parent=27 // pred_region
          _
        $region40: #{tpu_custom_call.1} parent=27 // pred_fallthru
          _
        // Predicated region
        $region41: #{tpu_custom_call.1} parent=27 // pred_check
          %p273 = pneg %p90
        $region42: #{tpu_custom_call.1} parent=27 // pred_check_branch
          %275 = sbr.rel (%p273) target = $region44
        $region43: #{tpu_custom_call.1} parent=27 // pred_region
          _
        $region44: #{tpu_custom_call.1} parent=27 // pred_fallthru
          _
      $region28: #{tpu_custom_call.1} parent=5 // pred_fallthru
        _
      %p276 = scmp.le.s32.totalorder 2, %s11
      // Predicated region
      $region45: #{tpu_custom_call.1} parent=5 // pred_check
        %p277 = pneg %p276
      $region46: #{tpu_custom_call.1} parent=5 // pred_check_branch
        %279 = sbr.rel (%p277) target = $region48
      $region47: #{tpu_custom_call.1} parent=5 // pred_region
        %s280 = ssub.s32 %s11, 2
      $region48: #{tpu_custom_call.1} parent=5 // pred_fallthru
        _
    $region6: #{tpu_custom_call.1} parent=1 // loop_footer
      %s15 = sadd.s32 1, %s11
    $region7: #{tpu_custom_call.1} parent=1 // loop_footer_branch
      %10 = sbr.rel target = $region3
    $region8: #{tpu_custom_call.1} parent=1 // loop_exit
      _
    %281 = vsyncpa [#allocation3], 1
    %s282 = scalar_lea.sflag [#allocation3], 1
    %283 = vsyncpa %s282, 1

</llo_original>
